<compile_context>
chip_gen: v7x
topology: tpu7x:2x2x1
jax: 0.10.0
libtpu: 0.0.40
codegen_flags: <defaults>
</compile_context>

<pallas_src>
import functools
import math

import jax
import jax.numpy as jnp
from jax.experimental import pallas as pl
from jax.experimental.pallas import tpu as pltpu

# Streamed-operand dtype (cast in the wrapper, NOT inside the kernel, so the
# HBM bandwidth win is real).  Accumulation is always f32.
MATMUL_DTYPE = jnp.bfloat16
TM_MAX = 1024            # M-tile upper bound; multiple of 128 (review: 512-2048)


def _round_up(x, m):
    return (x + m - 1) // m * m


def _pick_vmem_limit(needed_bytes):
    """Computed VMEM cap: >= 32 MiB wanted, <= ~3/4 of physical VMEM
    (v7x: 48 MiB of 64; v5e/v6e: 96 MiB of 128)."""
    phys = 128 * 1024 * 1024
    try:
        phys = int(pltpu.get_tpu_info().vmem_capacity_bytes)
    except Exception:
        pass
    hard_cap = (phys * 3) // 4
    want = max(32 * 1024 * 1024, 2 * int(needed_bytes))
    return max(min(want, hard_cap), 8 * 1024 * 1024)


# ----------------------------------------------------------------------------
# Pallas kernel: tap-shifted conv-as-GEMM over a VMEM-resident input slab
# ----------------------------------------------------------------------------
def _tap_conv_kernel(x_ref, w_ref, b_ref, o_ref, *,
                     cin, cout_pad, kh, kw, wp, tm, grid_m, use_mxu):
    # x_ref: (cin, m_cols)          channel-major padded input, resident across grid
    # w_ref: (kh*kw*cout_pad, cin)  per-tap weight stack (tap-major, 8-aligned rows)
    # b_ref: (cout_pad, 1)          f32 bias
    # o_ref: (cout_pad, tm)         f32 lane-dense output tile
    if grid_m == 1:
        base = 0                                            # fully static slicing
    else:
        base = pl.multiple_of(pl.program_id(0) * tm, tm)    # tm is a multiple of 128

    acc = jnp.zeros((cout_pad, tm), jnp.float32)
    for t in range(kh * kw):
        i, j = divmod(t, kw)
        shift = i * wp + j                                  # static per-tap offset
        xt = x_ref[:, pl.ds(base + shift, tm)]              # (cin, tm)
        wt = w_ref[pl.ds(t * cout_pad, cout_pad), :]        # (cout_pad, cin), 8-aligned
        if use_mxu:
            acc = acc + jnp.dot(wt, xt, preferred_element_type=jnp.float32)
        else:
            # VPU multiply-accumulate: the (cout_pad x cin) "matmul" is too small
            # to fill the MXU, and the kernel is HBM-bound regardless.
            xt32 = xt.astype(jnp.float32)
            wt32 = wt.astype(jnp.float32)
            for ci in range(cin):
                acc = acc + wt32[:, ci:ci + 1] * xt32[ci:ci + 1, :]

    o_ref[...] = (acc + b_ref[...]).astype(o_ref.dtype)


# ----------------------------------------------------------------------------
# Per-group wrapper: cylindric pad + channel-major flatten + pallas_call
# ----------------------------------------------------------------------------
def conv_group_pallas(xg_nchw, w_oihw, bias, kh, kw, *, tm_max=TM_MAX):
    """One channel group of CylindricConv2d.

    xg_nchw: (N, Cin_g, H, W) -> (Cout_g, N, H, W)  (channel-major output)."""
    n, cin, h, w = xg_nchw.shape
    cout = w_oihw.shape[0]
    ph, pw = kh // 2, kw // 2
    hp, wp = h + 2 * ph, w + 2 * pw
    hout, wout = hp - kh + 1, wp - kw + 1                    # == h, w for odd kernels

    # Cylindric pad (circular along W, zero along H), then channel-major flatten.
    xp = jnp.pad(xg_nchw, ((0, 0), (0, 0), (0, 0), (pw, pw)), mode="wrap")
    xp = jnp.pad(xp, ((0, 0), (0, 0), (ph, ph), (0, 0)), mode="constant")
    x_cm = jnp.transpose(xp, (1, 0, 2, 3)).reshape(cin, n * hp * wp)

    # Column geometry.  The kernel computes the conv at EVERY padded position
    # (hp_, wp_); the valid Hout x Wout window is sliced out afterwards.  This
    # keeps every tap a single static column shift of the flattened input.
    m_valid = n * hp * wp
    m_out = _round_up(m_valid, 128)
    tm = min(tm_max, m_out)
    m_out = _round_up(m_out, tm)
    grid_m = m_out // tm
    halo = (kh - 1) * wp + (kw - 1)                          # max static tap shift
    m_cols = _round_up(m_out + halo, 128)
    x_cm = jnp.pad(x_cm, ((0, 0), (0, m_cols - m_valid))).astype(MATMUL_DTYPE)

    # Weights: OIHW -> per-tap stack (KH*KW*Cout_pad, Cin), tap-major, Cout padded
    # to a sublane multiple so every in-kernel weight slice is 8-aligned.
    cout_pad = _round_up(max(cout, 8), 8)
    w_taps = jnp.transpose(w_oihw, (2, 3, 0, 1))             # (KH, KW, Cout, Cin)
    w_taps = jnp.pad(w_taps, ((0, 0), (0, 0), (0, cout_pad - cout), (0, 0)))
    w_stack = w_taps.reshape(kh * kw * cout_pad, cin).astype(MATMUL_DTYPE)
    b_pad = jnp.pad(bias, (0, cout_pad - cout)).reshape(cout_pad, 1).astype(jnp.float32)

    kernel = functools.partial(
        _tap_conv_kernel, cin=cin, cout_pad=cout_pad, kh=kh, kw=kw, wp=wp,
        tm=tm, grid_m=grid_m, use_mxu=(cin >= 8))

    itemsize = jnp.dtype(MATMUL_DTYPE).itemsize
    bytes_needed = 2 * (x_cm.size * itemsize + w_stack.size * itemsize
                        + b_pad.size * 4 + cout_pad * tm * 4)

    out = pl.pallas_call(
        kernel,
        out_shape=jax.ShapeDtypeStruct((cout_pad, m_out), jnp.float32),
        grid=(grid_m,),
        in_specs=[
            pl.BlockSpec((cin, m_cols), lambda m: (0, 0)),   # resident across the grid
            pl.BlockSpec((kh * kw * cout_pad, cin), lambda m: (0, 0)),
            pl.BlockSpec((cout_pad, 1), lambda m: (0, 0)),
        ],
        out_specs=pl.BlockSpec((cout_pad, tm), lambda m: (0, m)),
        compiler_params=pltpu.CompilerParams(
            dimension_semantics=("parallel",),               # shards M across TCs on v7x
            vmem_limit_bytes=_pick_vmem_limit(bytes_needed),
        ),
    )(x_cm, w_stack, b_pad)

    # Valid columns are q = n*Hp*Wp + r*Wp + c with r < Hout, c < Wout.
    out = out[:cout, :m_valid].reshape(cout, n, hp, wp)
    return out[:, :, :hout, :wout]


# ----------------------------------------------------------------------------
# Module-level glue (channel split, per-group call, concat back to NCHW)
# ----------------------------------------------------------------------------
def _slice_channels(num_channels, num_pieces):
    assert num_channels >= num_pieces
    residual = num_channels % num_pieces
    piece_size = num_channels // num_pieces
    return [piece_size + 1 if i < residual else piece_size
            for i in range(num_pieces)]


def cylindric_conv2d(x_nchw, params, in_groups, kernel_sizes, *, tm_max=TM_MAX):
    """Forward pass of CylindricConv2d.  x_nchw: (N, Cin, H, W) -> (N, Cout, H, W)."""
    for kh, kw in kernel_sizes:
        # 'same'-style cylindric padding only reproduces PyTorch for odd kernels
        assert kh % 2 == 1 and kw % 2 == 1, "odd kernel sizes required"

    group_outs = []
    start = 0
    for (w_oihw, bias), cin_g, (kh, kw) in zip(params, in_groups, kernel_sizes):
        xg = x_nchw[:, start:start + cin_g]
        start += cin_g
        group_outs.append(conv_group_pallas(xg, w_oihw, bias, kh, kw, tm_max=tm_max))
    # Channel-major concat, then ONE transpose back to NCHW for all groups.
    y = jnp.concatenate(group_outs, axis=0)                  # (Cout, N, H, W)
    return jnp.transpose(y, (1, 0, 2, 3))


# ----------------------------------------------------------------------------
# Deterministic parameter init (matches nn.Conv2d default init bounds)
# ----------------------------------------------------------------------------
def init_params(key, in_groups, out_groups, kernel_sizes):
    params = []
    for i, (cin_g, cout_g, (kh, kw)) in enumerate(zip(in_groups, out_groups, kernel_sizes)):
        kw_key, kb_key = jax.random.split(jax.random.fold_in(key, i))
        fan_in = cin_g * kh * kw
        bound = 1.0 / math.sqrt(fan_in)
        w = jax.random.uniform(kw_key, (cout_g, cin_g, kh, kw), jnp.float32,
                               minval=-bound, maxval=bound)          # OIHW
        b = jax.random.uniform(kb_key, (cout_g,), jnp.float32,
                               minval=-bound, maxval=bound)
        params.append((w, b))
    return params


# ----------------------------------------------------------------------------
# Plain-JAX reference (lax.conv) for correctness check
# ----------------------------------------------------------------------------
def reference_forward(x_nchw, params, in_groups, kernel_sizes):
    outputs = []
    start = 0
    for (w_oihw, bias), cin_g, (kh, kw) in zip(params, in_groups, kernel_sizes):
        xg = x_nchw[:, start:start + cin_g]
        start += cin_g
        xp = jnp.pad(xg, ((0, 0), (0, 0), (0, 0), (kw // 2, kw // 2)), mode="wrap")
        xp = jnp.pad(xp, ((0, 0), (0, 0), (kh // 2, kh // 2), (0, 0)), mode="constant")
        y = jax.lax.conv_general_dilated(
            xp, w_oihw, window_strides=(1, 1), padding="VALID",
            dimension_numbers=("NCHW", "OIHW", "NCHW"))
        outputs.append(y + bias[None, :, None, None])
    return jnp.concatenate(outputs, axis=1)


if __name__ == "__main__":
    # Module config (small, consistent with the PyTorch module):
    in_channels, out_channels = 4, 4
    kernel_sizes = [(3, 3), (3, 5)]                                  # (h, w) per group
    in_groups = _slice_channels(in_channels, len(kernel_sizes))      # [2, 2]
    out_groups = _slice_channels(out_channels, len(kernel_sizes))    # [2, 2]

    key = jax.random.PRNGKey(0)
    kx, kp = jax.random.split(key)
    x = jax.random.normal(kx, (2, in_channels, 16, 16), jnp.float32)  # NCHW
    params = init_params(kp, in_groups, out_groups, kernel_sizes)

    out = cylindric_conv2d(x, params, in_groups, kernel_sizes)
    out = jax.block_until_ready(out)

    ref = reference_forward(x, params, in_groups, kernel_sizes)
    assert out.shape == ref.shape == (2, out_channels, 16, 16), (out.shape, ref.shape)
    # bf16 operands (f32 accumulation) need a looser tolerance than the old 1e-5.
    tol = 2e-2 if jnp.dtype(MATMUL_DTYPE).itemsize < 4 else 1e-5
    err = float(jnp.max(jnp.abs(out - ref)))
    assert jnp.allclose(out, ref, atol=tol, rtol=tol), err

    print("KERNEL_OK")
</pallas_src>

<mosaic_0001>
module attributes {stable_mosaic.version = 11 : i64} {
  func.func @_tap_conv_kernel(%arg0: i32, %arg1: memref<2x896xbf16, #tpu.memory_space<vmem>>, %arg2: memref<72x2xbf16, #tpu.memory_space<vmem>>, %arg3: memref<8x1xf32, #tpu.memory_space<vmem>>, %arg4: memref<8x768xf32, #tpu.memory_space<vmem>>) attributes {dimension_semantics = [#tpu.dimension_semantics<parallel>], iteration_bounds = array<i64: 1>, scalar_prefetch = 0 : i64, scratch_operands = 0 : i64, tpu.core_type = #tpu.core_type<tc>, window_params = [{pipeline_mode = #tpu.pipeline_mode<synchronous>, transform_indices = @transform_0, window_bounds = array<i64: 2, 896>}, {pipeline_mode = #tpu.pipeline_mode<synchronous>, transform_indices = @transform_1, window_bounds = array<i64: 72, 2>}, {pipeline_mode = #tpu.pipeline_mode<synchronous>, transform_indices = @transform_2, window_bounds = array<i64: 8, 1>}, {transform_indices = @transform_3, window_bounds = array<i64: 8, 768>}]} {
    %cst = arith.constant 0.000000e+00 : f32
    %0 = vector.broadcast %cst : f32 to vector<8x768xf32>
    %c0 = arith.constant 0 : index
    %c0_0 = arith.constant 0 : index
    %1 = vector.load %arg1[%c0, %c0_0] : memref<2x896xbf16, #tpu.memory_space<vmem>>, vector<2x768xbf16>
    %c0_1 = arith.constant 0 : index
    %c0_2 = arith.constant 0 : index
    %2 = vector.load %arg2[%c0_1, %c0_2] : memref<72x2xbf16, #tpu.memory_space<vmem>>, vector<8x2xbf16>
    %3 = arith.extf %1 : vector<2x768xbf16> to vector<2x768xf32>
    %4 = arith.extf %2 : vector<8x2xbf16> to vector<8x2xf32>
    %5 = vector.extract_strided_slice %4 {offsets = [0, 0], sizes = [8, 1], strides = [1, 1]} : vector<8x2xf32> to vector<8x1xf32>
    %6 = vector.extract_strided_slice %3 {offsets = [0, 0], sizes = [1, 768], strides = [1, 1]} : vector<2x768xf32> to vector<1x768xf32>
    %7 = vector.broadcast %5 : vector<8x1xf32> to vector<8x768xf32>
    %8 = vector.broadcast %6 : vector<1x768xf32> to vector<8x768xf32>
    %9 = arith.mulf %7, %8 : vector<8x768xf32>
    %10 = arith.addf %0, %9 : vector<8x768xf32>
    %11 = vector.extract_strided_slice %4 {offsets = [0, 1], sizes = [8, 1], strides = [1, 1]} : vector<8x2xf32> to vector<8x1xf32>
    %12 = vector.extract_strided_slice %3 {offsets = [1, 0], sizes = [1, 768], strides = [1, 1]} : vector<2x768xf32> to vector<1x768xf32>
    %13 = vector.broadcast %11 : vector<8x1xf32> to vector<8x768xf32>
    %14 = vector.broadcast %12 : vector<1x768xf32> to vector<8x768xf32>
    %15 = arith.mulf %13, %14 : vector<8x768xf32>
    %16 = arith.addf %10, %15 : vector<8x768xf32>
    %c0_3 = arith.constant 0 : index
    %c1 = arith.constant 1 : index
    %17 = vector.load %arg1[%c0_3, %c1] : memref<2x896xbf16, #tpu.memory_space<vmem>>, vector<2x768xbf16>
    %c8 = arith.constant 8 : index
    %c0_4 = arith.constant 0 : index
    %18 = vector.load %arg2[%c8, %c0_4] : memref<72x2xbf16, #tpu.memory_space<vmem>>, vector<8x2xbf16>
    %19 = arith.extf %17 : vector<2x768xbf16> to vector<2x768xf32>
    %20 = arith.extf %18 : vector<8x2xbf16> to vector<8x2xf32>
    %21 = vector.extract_strided_slice %20 {offsets = [0, 0], sizes = [8, 1], strides = [1, 1]} : vector<8x2xf32> to vector<8x1xf32>
    %22 = vector.extract_strided_slice %19 {offsets = [0, 0], sizes = [1, 768], strides = [1, 1]} : vector<2x768xf32> to vector<1x768xf32>
    %23 = vector.broadcast %21 : vector<8x1xf32> to vector<8x768xf32>
    %24 = vector.broadcast %22 : vector<1x768xf32> to vector<8x768xf32>
    %25 = arith.mulf %23, %24 : vector<8x768xf32>
    %26 = arith.addf %16, %25 : vector<8x768xf32>
    %27 = vector.extract_strided_slice %20 {offsets = [0, 1], sizes = [8, 1], strides = [1, 1]} : vector<8x2xf32> to vector<8x1xf32>
    %28 = vector.extract_strided_slice %19 {offsets = [1, 0], sizes = [1, 768], strides = [1, 1]} : vector<2x768xf32> to vector<1x768xf32>
    %29 = vector.broadcast %27 : vector<8x1xf32> to vector<8x768xf32>
    %30 = vector.broadcast %28 : vector<1x768xf32> to vector<8x768xf32>
    %31 = arith.mulf %29, %30 : vector<8x768xf32>
    %32 = arith.addf %26, %31 : vector<8x768xf32>
    %c0_5 = arith.constant 0 : index
    %c2 = arith.constant 2 : index
    %33 = vector.load %arg1[%c0_5, %c2] : memref<2x896xbf16, #tpu.memory_space<vmem>>, vector<2x768xbf16>
    %c16 = arith.constant 16 : index
    %c0_6 = arith.constant 0 : index
    %34 = vector.load %arg2[%c16, %c0_6] : memref<72x2xbf16, #tpu.memory_space<vmem>>, vector<8x2xbf16>
    %35 = arith.extf %33 : vector<2x768xbf16> to vector<2x768xf32>
    %36 = arith.extf %34 : vector<8x2xbf16> to vector<8x2xf32>
    %37 = vector.extract_strided_slice %36 {offsets = [0, 0], sizes = [8, 1], strides = [1, 1]} : vector<8x2xf32> to vector<8x1xf32>
    %38 = vector.extract_strided_slice %35 {offsets = [0, 0], sizes = [1, 768], strides = [1, 1]} : vector<2x768xf32> to vector<1x768xf32>
    %39 = vector.broadcast %37 : vector<8x1xf32> to vector<8x768xf32>
    %40 = vector.broadcast %38 : vector<1x768xf32> to vector<8x768xf32>
    %41 = arith.mulf %39, %40 : vector<8x768xf32>
    %42 = arith.addf %32, %41 : vector<8x768xf32>
    %43 = vector.extract_strided_slice %36 {offsets = [0, 1], sizes = [8, 1], strides = [1, 1]} : vector<8x2xf32> to vector<8x1xf32>
    %44 = vector.extract_strided_slice %35 {offsets = [1, 0], sizes = [1, 768], strides = [1, 1]} : vector<2x768xf32> to vector<1x768xf32>
    %45 = vector.broadcast %43 : vector<8x1xf32> to vector<8x768xf32>
    %46 = vector.broadcast %44 : vector<1x768xf32> to vector<8x768xf32>
    %47 = arith.mulf %45, %46 : vector<8x768xf32>
    %48 = arith.addf %42, %47 : vector<8x768xf32>
    %c0_7 = arith.constant 0 : index
    %c18 = arith.constant 18 : index
    %49 = vector.load %arg1[%c0_7, %c18] : memref<2x896xbf16, #tpu.memory_space<vmem>>, vector<2x768xbf16>
    %c24 = arith.constant 24 : index
    %c0_8 = arith.constant 0 : index
    %50 = vector.load %arg2[%c24, %c0_8] : memref<72x2xbf16, #tpu.memory_space<vmem>>, vector<8x2xbf16>
    %51 = arith.extf %49 : vector<2x768xbf16> to vector<2x768xf32>
    %52 = arith.extf %50 : vector<8x2xbf16> to vector<8x2xf32>
    %53 = vector.extract_strided_slice %52 {offsets = [0, 0], sizes = [8, 1], strides = [1, 1]} : vector<8x2xf32> to vector<8x1xf32>
    %54 = vector.extract_strided_slice %51 {offsets = [0, 0], sizes = [1, 768], strides = [1, 1]} : vector<2x768xf32> to vector<1x768xf32>
    %55 = vector.broadcast %53 : vector<8x1xf32> to vector<8x768xf32>
    %56 = vector.broadcast %54 : vector<1x768xf32> to vector<8x768xf32>
    %57 = arith.mulf %55, %56 : vector<8x768xf32>
    %58 = arith.addf %48, %57 : vector<8x768xf32>
    %59 = vector.extract_strided_slice %52 {offsets = [0, 1], sizes = [8, 1], strides = [1, 1]} : vector<8x2xf32> to vector<8x1xf32>
    %60 = vector.extract_strided_slice %51 {offsets = [1, 0], sizes = [1, 768], strides = [1, 1]} : vector<2x768xf32> to vector<1x768xf32>
    %61 = vector.broadcast %59 : vector<8x1xf32> to vector<8x768xf32>
    %62 = vector.broadcast %60 : vector<1x768xf32> to vector<8x768xf32>
    %63 = arith.mulf %61, %62 : vector<8x768xf32>
    %64 = arith.addf %58, %63 : vector<8x768xf32>
    %c0_9 = arith.constant 0 : index
    %c19 = arith.constant 19 : index
    %65 = vector.load %arg1[%c0_9, %c19] : memref<2x896xbf16, #tpu.memory_space<vmem>>, vector<2x768xbf16>
    %c32 = arith.constant 32 : index
    %c0_10 = arith.constant 0 : index
    %66 = vector.load %arg2[%c32, %c0_10] : memref<72x2xbf16, #tpu.memory_space<vmem>>, vector<8x2xbf16>
    %67 = arith.extf %65 : vector<2x768xbf16> to vector<2x768xf32>
    %68 = arith.extf %66 : vector<8x2xbf16> to vector<8x2xf32>
    %69 = vector.extract_strided_slice %68 {offsets = [0, 0], sizes = [8, 1], strides = [1, 1]} : vector<8x2xf32> to vector<8x1xf32>
    %70 = vector.extract_strided_slice %67 {offsets = [0, 0], sizes = [1, 768], strides = [1, 1]} : vector<2x768xf32> to vector<1x768xf32>
    %71 = vector.broadcast %69 : vector<8x1xf32> to vector<8x768xf32>
    %72 = vector.broadcast %70 : vector<1x768xf32> to vector<8x768xf32>
    %73 = arith.mulf %71, %72 : vector<8x768xf32>
    %74 = arith.addf %64, %73 : vector<8x768xf32>
    %75 = vector.extract_strided_slice %68 {offsets = [0, 1], sizes = [8, 1], strides = [1, 1]} : vector<8x2xf32> to vector<8x1xf32>
    %76 = vector.extract_strided_slice %67 {offsets = [1, 0], sizes = [1, 768], strides = [1, 1]} : vector<2x768xf32> to vector<1x768xf32>
    %77 = vector.broadcast %75 : vector<8x1xf32> to vector<8x768xf32>
    %78 = vector.broadcast %76 : vector<1x768xf32> to vector<8x768xf32>
    %79 = arith.mulf %77, %78 : vector<8x768xf32>
    %80 = arith.addf %74, %79 : vector<8x768xf32>
    %c0_11 = arith.constant 0 : index
    %c20 = arith.constant 20 : index
    %81 = vector.load %arg1[%c0_11, %c20] : memref<2x896xbf16, #tpu.memory_space<vmem>>, vector<2x768xbf16>
    %c40 = arith.constant 40 : index
    %c0_12 = arith.constant 0 : index
    %82 = vector.load %arg2[%c40, %c0_12] : memref<72x2xbf16, #tpu.memory_space<vmem>>, vector<8x2xbf16>
    %83 = arith.extf %81 : vector<2x768xbf16> to vector<2x768xf32>
    %84 = arith.extf %82 : vector<8x2xbf16> to vector<8x2xf32>
    %85 = vector.extract_strided_slice %84 {offsets = [0, 0], sizes = [8, 1], strides = [1, 1]} : vector<8x2xf32> to vector<8x1xf32>
    %86 = vector.extract_strided_slice %83 {offsets = [0, 0], sizes = [1, 768], strides = [1, 1]} : vector<2x768xf32> to vector<1x768xf32>
    %87 = vector.broadcast %85 : vector<8x1xf32> to vector<8x768xf32>
    %88 = vector.broadcast %86 : vector<1x768xf32> to vector<8x768xf32>
    %89 = arith.mulf %87, %88 : vector<8x768xf32>
    %90 = arith.addf %80, %89 : vector<8x768xf32>
    %91 = vector.extract_strided_slice %84 {offsets = [0, 1], sizes = [8, 1], strides = [1, 1]} : vector<8x2xf32> to vector<8x1xf32>
    %92 = vector.extract_strided_slice %83 {offsets = [1, 0], sizes = [1, 768], strides = [1, 1]} : vector<2x768xf32> to vector<1x768xf32>
    %93 = vector.broadcast %91 : vector<8x1xf32> to vector<8x768xf32>
    %94 = vector.broadcast %92 : vector<1x768xf32> to vector<8x768xf32>
    %95 = arith.mulf %93, %94 : vector<8x768xf32>
    %96 = arith.addf %90, %95 : vector<8x768xf32>
    %c0_13 = arith.constant 0 : index
    %c36 = arith.constant 36 : index
    %97 = vector.load %arg1[%c0_13, %c36] : memref<2x896xbf16, #tpu.memory_space<vmem>>, vector<2x768xbf16>
    %c48 = arith.constant 48 : index
    %c0_14 = arith.constant 0 : index
    %98 = vector.load %arg2[%c48, %c0_14] : memref<72x2xbf16, #tpu.memory_space<vmem>>, vector<8x2xbf16>
    %99 = arith.extf %97 : vector<2x768xbf16> to vector<2x768xf32>
    %100 = arith.extf %98 : vector<8x2xbf16> to vector<8x2xf32>
    %101 = vector.extract_strided_slice %100 {offsets = [0, 0], sizes = [8, 1], strides = [1, 1]} : vector<8x2xf32> to vector<8x1xf32>
    %102 = vector.extract_strided_slice %99 {offsets = [0, 0], sizes = [1, 768], strides = [1, 1]} : vector<2x768xf32> to vector<1x768xf32>
    %103 = vector.broadcast %101 : vector<8x1xf32> to vector<8x768xf32>
    %104 = vector.broadcast %102 : vector<1x768xf32> to vector<8x768xf32>
    %105 = arith.mulf %103, %104 : vector<8x768xf32>
    %106 = arith.addf %96, %105 : vector<8x768xf32>
    %107 = vector.extract_strided_slice %100 {offsets = [0, 1], sizes = [8, 1], strides = [1, 1]} : vector<8x2xf32> to vector<8x1xf32>
    %108 = vector.extract_strided_slice %99 {offsets = [1, 0], sizes = [1, 768], strides = [1, 1]} : vector<2x768xf32> to vector<1x768xf32>
    %109 = vector.broadcast %107 : vector<8x1xf32> to vector<8x768xf32>
    %110 = vector.broadcast %108 : vector<1x768xf32> to vector<8x768xf32>
    %111 = arith.mulf %109, %110 : vector<8x768xf32>
    %112 = arith.addf %106, %111 : vector<8x768xf32>
    %c0_15 = arith.constant 0 : index
    %c37 = arith.constant 37 : index
    %113 = vector.load %arg1[%c0_15, %c37] : memref<2x896xbf16, #tpu.memory_space<vmem>>, vector<2x768xbf16>
    %c56 = arith.constant 56 : index
    %c0_16 = arith.constant 0 : index
    %114 = vector.load %arg2[%c56, %c0_16] : memref<72x2xbf16, #tpu.memory_space<vmem>>, vector<8x2xbf16>
    %115 = arith.extf %113 : vector<2x768xbf16> to vector<2x768xf32>
    %116 = arith.extf %114 : vector<8x2xbf16> to vector<8x2xf32>
    %117 = vector.extract_strided_slice %116 {offsets = [0, 0], sizes = [8, 1], strides = [1, 1]} : vector<8x2xf32> to vector<8x1xf32>
    %118 = vector.extract_strided_slice %115 {offsets = [0, 0], sizes = [1, 768], strides = [1, 1]} : vector<2x768xf32> to vector<1x768xf32>
    %119 = vector.broadcast %117 : vector<8x1xf32> to vector<8x768xf32>
    %120 = vector.broadcast %118 : vector<1x768xf32> to vector<8x768xf32>
    %121 = arith.mulf %119, %120 : vector<8x768xf32>
    %122 = arith.addf %112, %121 : vector<8x768xf32>
    %123 = vector.extract_strided_slice %116 {offsets = [0, 1], sizes = [8, 1], strides = [1, 1]} : vector<8x2xf32> to vector<8x1xf32>
    %124 = vector.extract_strided_slice %115 {offsets = [1, 0], sizes = [1, 768], strides = [1, 1]} : vector<2x768xf32> to vector<1x768xf32>
    %125 = vector.broadcast %123 : vector<8x1xf32> to vector<8x768xf32>
    %126 = vector.broadcast %124 : vector<1x768xf32> to vector<8x768xf32>
    %127 = arith.mulf %125, %126 : vector<8x768xf32>
    %128 = arith.addf %122, %127 : vector<8x768xf32>
    %c0_17 = arith.constant 0 : index
    %c38 = arith.constant 38 : index
    %129 = vector.load %arg1[%c0_17, %c38] : memref<2x896xbf16, #tpu.memory_space<vmem>>, vector<2x768xbf16>
    %c64 = arith.constant 64 : index
    %c0_18 = arith.constant 0 : index
    %130 = vector.load %arg2[%c64, %c0_18] : memref<72x2xbf16, #tpu.memory_space<vmem>>, vector<8x2xbf16>
    %131 = arith.extf %129 : vector<2x768xbf16> to vector<2x768xf32>
    %132 = arith.extf %130 : vector<8x2xbf16> to vector<8x2xf32>
    %133 = vector.extract_strided_slice %132 {offsets = [0, 0], sizes = [8, 1], strides = [1, 1]} : vector<8x2xf32> to vector<8x1xf32>
    %134 = vector.extract_strided_slice %131 {offsets = [0, 0], sizes = [1, 768], strides = [1, 1]} : vector<2x768xf32> to vector<1x768xf32>
    %135 = vector.broadcast %133 : vector<8x1xf32> to vector<8x768xf32>
    %136 = vector.broadcast %134 : vector<1x768xf32> to vector<8x768xf32>
    %137 = arith.mulf %135, %136 : vector<8x768xf32>
    %138 = arith.addf %128, %137 : vector<8x768xf32>
    %139 = vector.extract_strided_slice %132 {offsets = [0, 1], sizes = [8, 1], strides = [1, 1]} : vector<8x2xf32> to vector<8x1xf32>
    %140 = vector.extract_strided_slice %131 {offsets = [1, 0], sizes = [1, 768], strides = [1, 1]} : vector<2x768xf32> to vector<1x768xf32>
    %141 = vector.broadcast %139 : vector<8x1xf32> to vector<8x768xf32>
    %142 = vector.broadcast %140 : vector<1x768xf32> to vector<8x768xf32>
    %143 = arith.mulf %141, %142 : vector<8x768xf32>
    %144 = arith.addf %138, %143 : vector<8x768xf32>
    %c0_19 = arith.constant 0 : index
    %c0_20 = arith.constant 0 : index
    %145 = vector.load %arg3[%c0_19, %c0_20] : memref<8x1xf32, #tpu.memory_space<vmem>>, vector<8x1xf32>
    %146 = vector.broadcast %145 : vector<8x1xf32> to vector<8x768xf32>
    %147 = arith.addf %144, %146 : vector<8x768xf32>
    %c0_21 = arith.constant 0 : index
    %c0_22 = arith.constant 0 : index
    %148 = vector.load %arg4[%c0_21, %c0_22] : memref<8x768xf32, #tpu.memory_space<vmem>>, vector<8x768xf32>
    tpu.vector_store %arg4[%c0_21, %c0_22], %147 {strides = array<i32>} : memref<8x768xf32, #tpu.memory_space<vmem>>, vector<8x768xf32>,
    return
  }
  func.func @transform_0(%arg0: i32) -> (i32, i32) {
    %c0_i32 = arith.constant 0 : i32
    %c0_i32_0 = arith.constant 0 : i32
    %c0_i32_1 = arith.constant 0 : i32
    return %c0_i32, %c0_i32_0 : i32, i32
  }
  func.func @transform_1(%arg0: i32) -> (i32, i32) {
    %c0_i32 = arith.constant 0 : i32
    %c0_i32_0 = arith.constant 0 : i32
    %c0_i32_1 = arith.constant 0 : i32
    return %c0_i32, %c0_i32_0 : i32, i32
  }
  func.func @transform_2(%arg0: i32) -> (i32, i32) {
    %c0_i32 = arith.constant 0 : i32
    %c0_i32_0 = arith.constant 0 : i32
    %c0_i32_1 = arith.constant 0 : i32
    return %c0_i32, %c0_i32_0 : i32, i32
  }
  func.func @transform_3(%arg0: i32) -> (i32, i32) {
    %c0_i32 = arith.constant 0 : i32
    %c0_i32_0 = arith.constant 0 : i32
    return %c0_i32, %arg0 : i32, i32
  }
}

</mosaic_0001>

<llo_original>
// kernel: tpu_custom_call.1
$region0: #{tpu_custom_call.1}
  #allocation0 [shape = 'u32[]', space=smem, size = 0x4, offset = 0x4, fixed_abs, tag = 'smem constant byte address 0x4 - core index']
  #allocation1 [shape = 'u32[144,128]{1,0:T(1,128)}', space=vmem, size = 0x12000, scoped, tag = 'internal scratch']
  %s0 = inlined_call_operand.vmem [shape: bf16[2,896], index: 0, kind: input, shape index: {}]
  %s1 = inlined_call_operand.vmem [shape: bf16[72,2], index: 1, kind: input, shape index: {}]
  %s2 = inlined_call_operand.vmem [shape: f32[8,1], index: 2, kind: input, shape index: {}]
  %s3 = inlined_call_operand.hbm [shape: f32[8,768], index: 3, kind: output, shape index: {}]
  %s4 = sld [smem:[#allocation0]]
  $region22: #{tpu_custom_call.1} parent=0
    _
  %s6 = ssub.s32 1, %s4
  %s7 = scalar_select 0, %s6, %s4
  $region1: #{tpu_custom_call.1} parent=0
    #allocation2 [shape = 'u8[24576]{0}', space=vmem, size = 0x6000, scoped, tag = 'output window, operand 0, single buffered']
    #allocation3 [shape = 's32[1]{0}', space=sflag, size = 0x4, scoped, tag = 'scoped memory for tpu_custom_call.1']
    %8 = vsyncpa [#allocation3], 0
    // Predicated region
    $region2: #{tpu_custom_call.1} parent=1 // pred_check
      _
    $region3: #{tpu_custom_call.1} parent=1 // pred_check_branch
      %10 = sbr.rel (0) target = $region5
    $region4: #{tpu_custom_call.1} parent=1 // pred_region
      _
    $region5: #{tpu_custom_call.1} parent=1 // pred_fallthru
      _
    // Predicated region
    $region6: #{tpu_custom_call.1} parent=1 // pred_check
      _
    $region7: #{tpu_custom_call.1} parent=1 // pred_check_branch
      %12 = sbr.rel (0) target = $region9
    $region8: #{tpu_custom_call.1} parent=1 // pred_region
      _
    $region9: #{tpu_custom_call.1} parent=1 // pred_fallthru
      _
    // Predicated region
    $region10: #{tpu_custom_call.1} parent=1 // pred_check
      _
    $region11: #{tpu_custom_call.1} parent=1 // pred_check_branch
      %14 = sbr.rel (0) target = $region13
    $region12: #{tpu_custom_call.1} parent=1 // pred_region
      _
    $region13: #{tpu_custom_call.1} parent=1 // pred_fallthru
      _
    %v15 = vld [vmem:[%s0] sm:$0x3f]
    %v16 = vld [vmem:[%s1] sm:$0xf]
    %v17 = vunpack.c.l.bf16 %v15
    %v18 = vunpack.c.h.bf16 %v15
    %v19 = vunpack.c.l.bf16 %v16
    %21 = vset.pattern.permute.xlu0 0
    %22 = vperm.xlu0 %21, %v19
    %v23 = vpop.permute.xlu0 %22
    %v27 = vlaneseq
    %v28 = vshrl.u32 %v27, 7
    %v29 = vsub.s32 0, %v28
    %v30 = vrot.slane %v17, %v29
    %v31 = vlaneseq
    %v32 = vshrl.u32 %v31, 7
    %v33 = vsub.s32 2, %v32
    %v34 = vrot.slane %v17, %v33
    %v35 = vlaneseq
    %v36 = vshrl.u32 %v35, 7
    %v37 = vsub.s32 4, %v36
    %v38 = vrot.slane %v17, %v37
    %v39 = vlaneseq
    %v40 = vshrl.u32 %v39, 7
    %v41 = vsub.s32 6, %v40
    %v42 = vrot.slane %v17, %v41
    %v43 = vlaneseq
    %v44 = vshrl.u32 %v43, 7
    %v45 = vsub.s32 0, %v44
    %v46 = vrot.slane %v18, %v45
    %v47 = vlaneseq
    %v48 = vshrl.u32 %v47, 7
    %v49 = vsub.s32 2, %v48
    %v50 = vrot.slane %v18, %v49
    %v57 = vlaneseq
    %v58 = vshrl.u32 %v57, 7
    %v59 = vsub.s32 0, %v58
    %v60 = vrot.slane %v30, %v59
    %v61 = vlaneseq
    %v62 = vshrl.u32 %v61, 7
    %v63 = vsub.s32 0, %v62
    %v64 = vrot.slane %v34, %v63
    %v65 = vlaneseq
    %v66 = vshrl.u32 %v65, 7
    %v67 = vsub.s32 0, %v66
    %v68 = vrot.slane %v38, %v67
    %v69 = vlaneseq
    %v70 = vshrl.u32 %v69, 7
    %v71 = vsub.s32 0, %v70
    %v72 = vrot.slane %v42, %v71
    %v73 = vlaneseq
    %v74 = vshrl.u32 %v73, 7
    %v75 = vsub.s32 0, %v74
    %v76 = vrot.slane %v46, %v75
    %v77 = vlaneseq
    %v78 = vshrl.u32 %v77, 7
    %v79 = vsub.s32 0, %v78
    %v80 = vrot.slane %v50, %v79
    %v81 = vmul.f32 %v23, %v60
    %v82 = vmul.f32 %v23, %v64
    %v83 = vmul.f32 %v23, %v68
    %v84 = vmul.f32 %v23, %v72
    %v85 = vmul.f32 %v23, %v76
    %v86 = vmul.f32 %v23, %v80
    %v87 = vadd.f32 %v81, 0.0
    %v88 = vadd.f32 %v82, 0.0
    %v89 = vadd.f32 %v83, 0.0
    %v90 = vadd.f32 %v84, 0.0
    %v91 = vadd.f32 %v85, 0.0
    %v92 = vadd.f32 %v86, 0.0
    %93 = vset.pattern.permute.xlu0 1
    %94 = vperm.xlu0 %93, %v19
    %v95 = vpop.permute.xlu0 %94
    %v97 = vlaneseq
    %v98 = vshrl.u32 %v97, 7
    %v99 = vsub.s32 1, %v98
    %v100 = vrot.slane %v17, %v99
    %v101 = vlaneseq
    %v102 = vshrl.u32 %v101, 7
    %v103 = vsub.s32 3, %v102
    %v104 = vrot.slane %v17, %v103
    %v105 = vlaneseq
    %v106 = vshrl.u32 %v105, 7
    %v107 = vsub.s32 5, %v106
    %v108 = vrot.slane %v17, %v107
    %v109 = vlaneseq
    %v110 = vshrl.u32 %v109, 7
    %v111 = vsub.s32 7, %v110
    %v112 = vrot.slane %v17, %v111
    %v113 = vlaneseq
    %v114 = vshrl.u32 %v113, 7
    %v115 = vsub.s32 1, %v114
    %v116 = vrot.slane %v18, %v115
    %v117 = vlaneseq
    %v118 = vshrl.u32 %v117, 7
    %v119 = vsub.s32 3, %v118
    %v120 = vrot.slane %v18, %v119
    %v127 = vlaneseq
    %v128 = vshrl.u32 %v127, 7
    %v129 = vsub.s32 1, %v128
    %v130 = vrot.slane %v100, %v129
    %v131 = vlaneseq
    %v132 = vshrl.u32 %v131, 7
    %v133 = vsub.s32 1, %v132
    %v134 = vrot.slane %v104, %v133
    %v135 = vlaneseq
    %v136 = vshrl.u32 %v135, 7
    %v137 = vsub.s32 1, %v136
    %v138 = vrot.slane %v108, %v137
    %v139 = vlaneseq
    %v140 = vshrl.u32 %v139, 7
    %v141 = vsub.s32 1, %v140
    %v142 = vrot.slane %v112, %v141
    %v143 = vlaneseq
    %v144 = vshrl.u32 %v143, 7
    %v145 = vsub.s32 1, %v144
    %v146 = vrot.slane %v116, %v145
    %v147 = vlaneseq
    %v148 = vshrl.u32 %v147, 7
    %v149 = vsub.s32 1, %v148
    %v150 = vrot.slane %v120, %v149
    %v151 = vmul.f32 %v95, %v130
    %v152 = vmul.f32 %v95, %v134
    %v153 = vmul.f32 %v95, %v138
    %v154 = vmul.f32 %v95, %v142
    %v155 = vmul.f32 %v95, %v146
    %v156 = vmul.f32 %v95, %v150
    %v157 = vadd.f32 %v87, %v151
    %v158 = vadd.f32 %v88, %v152
    %v159 = vadd.f32 %v89, %v153
    %v160 = vadd.f32 %v90, %v154
    %v161 = vadd.f32 %v91, %v155
    %v162 = vadd.f32 %v92, %v156
    %v163 = vld [vmem:[%s0] sm:$0x7f]
    %v164 = vld [vmem:[%s1 + $0x4] sm:$0xf]
    %v165 = vunpack.c.l.bf16 %v163
    %v166 = vunpack.c.h.bf16 %v163
    %v167 = vunpack.c.l.bf16 %v164
    %169 = vset.pattern.permute.xlu0 0
    %170 = vperm.xlu0 %169, %v167
    %v171 = vpop.permute.xlu0 %170
    %v175 = vlaneseq
    %v176 = vshrl.u32 %v175, 7
    %v177 = vsub.s32 0, %v176
    %v178 = vrot.slane %v165, %v177
    %v179 = vlaneseq
    %v180 = vshrl.u32 %v179, 7
    %v181 = vsub.s32 2, %v180
    %v182 = vrot.slane %v165, %v181
    %v183 = vlaneseq
    %v184 = vshrl.u32 %v183, 7
    %v185 = vsub.s32 4, %v184
    %v186 = vrot.slane %v165, %v185
    %v187 = vlaneseq
    %v188 = vshrl.u32 %v187, 7
    %v189 = vsub.s32 6, %v188
    %v190 = vrot.slane %v165, %v189
    %v191 = vlaneseq
    %v192 = vshrl.u32 %v191, 7
    %v193 = vsub.s32 0, %v192
    %v194 = vrot.slane %v166, %v193
    %v195 = vlaneseq
    %v196 = vshrl.u32 %v195, 7
    %v197 = vsub.s32 2, %v196
    %v198 = vrot.slane %v166, %v197
    %v199 = vlaneseq
    %v200 = vshrl.u32 %v199, 7
    %v201 = vsub.s32 4, %v200
    %v202 = vrot.slane %v166, %v201
    %v210 = vlaneseq
    %v211 = vshrl.u32 %v210, 7
    %v212 = vsub.s32 0, %v211
    %v213 = vrot.slane %v178, %v212
    %v214 = vlaneseq
    %v215 = vshrl.u32 %v214, 7
    %v216 = vsub.s32 0, %v215
    %v217 = vrot.slane %v182, %v216
    %v218 = vlaneseq
    %v219 = vshrl.u32 %v218, 7
    %v220 = vsub.s32 0, %v219
    %v221 = vrot.slane %v186, %v220
    %v222 = vlaneseq
    %v223 = vshrl.u32 %v222, 7
    %v224 = vsub.s32 0, %v223
    %v225 = vrot.slane %v190, %v224
    %v226 = vlaneseq
    %v227 = vshrl.u32 %v226, 7
    %v228 = vsub.s32 0, %v227
    %v229 = vrot.slane %v194, %v228
    %v230 = vlaneseq
    %v231 = vshrl.u32 %v230, 7
    %v232 = vsub.s32 0, %v231
    %v233 = vrot.slane %v198, %v232
    %v234 = vlaneseq
    %v235 = vshrl.u32 %v234, 7
    %v236 = vsub.s32 0, %v235
    %v237 = vrot.slane %v202, %v236
    %v238 = vmul.f32 %v171, %v213
    %v239 = vmul.f32 %v171, %v217
    %v240 = vmul.f32 %v171, %v221
    %v241 = vmul.f32 %v171, %v225
    %v242 = vmul.f32 %v171, %v229
    %v243 = vmul.f32 %v171, %v233
    %v244 = vmul.f32 %v171, %v237
    %252 = vrot.lane.b32.xlu0 %v238, 127
    %v253 = vpop.permute.xlu0 %252
    %254 = vrot.lane.b32.xlu0 %v239, 127
    %v255 = vpop.permute.xlu0 %254
    %256 = vrot.lane.b32.xlu0 %v240, 127
    %v257 = vpop.permute.xlu0 %256
    %258 = vrot.lane.b32.xlu0 %v241, 127
    %v259 = vpop.permute.xlu0 %258
    %260 = vrot.lane.b32.xlu0 %v242, 127
    %v261 = vpop.permute.xlu0 %260
    %262 = vrot.lane.b32.xlu0 %v243, 127
    %v263 = vpop.permute.xlu0 %262
    %264 = vrot.lane.b32.xlu0 %v244, 127
    %v265 = vpop.permute.xlu0 %264
    %vm266 = vcmask 1039360
    %v267 = vsel %vm266, %v253, %v255
    %v268 = vsel %vm266, %v255, %v257
    %v269 = vsel %vm266, %v257, %v259
    %v270 = vsel %vm266, %v259, %v261
    %v271 = vsel %vm266, %v261, %v263
    %v272 = vsel %vm266, %v263, %v265
    %v279 = vadd.f32 %v157, %v267
    %v280 = vadd.f32 %v158, %v268
    %v281 = vadd.f32 %v159, %v269
    %v282 = vadd.f32 %v160, %v270
    %v283 = vadd.f32 %v161, %v271
    %v284 = vadd.f32 %v162, %v272
    %285 = vset.pattern.permute.xlu0 1
    %286 = vperm.xlu0 %285, %v167
    %v287 = vpop.permute.xlu0 %286
    %v289 = vlaneseq
    %v290 = vshrl.u32 %v289, 7
    %v291 = vsub.s32 1, %v290
    %v292 = vrot.slane %v165, %v291
    %v293 = vlaneseq
    %v294 = vshrl.u32 %v293, 7
    %v295 = vsub.s32 3, %v294
    %v296 = vrot.slane %v165, %v295
    %v297 = vlaneseq
    %v298 = vshrl.u32 %v297, 7
    %v299 = vsub.s32 5, %v298
    %v300 = vrot.slane %v165, %v299
    %v301 = vlaneseq
    %v302 = vshrl.u32 %v301, 7
    %v303 = vsub.s32 7, %v302
    %v304 = vrot.slane %v165, %v303
    %v305 = vlaneseq
    %v306 = vshrl.u32 %v305, 7
    %v307 = vsub.s32 1, %v306
    %v308 = vrot.slane %v166, %v307
    %v309 = vlaneseq
    %v310 = vshrl.u32 %v309, 7
    %v311 = vsub.s32 3, %v310
    %v312 = vrot.slane %v166, %v311
    %v313 = vlaneseq
    %v314 = vshrl.u32 %v313, 7
    %v315 = vsub.s32 5, %v314
    %v316 = vrot.slane %v166, %v315
    %v324 = vlaneseq
    %v325 = vshrl.u32 %v324, 7
    %v326 = vsub.s32 1, %v325
    %v327 = vrot.slane %v292, %v326
    %v328 = vlaneseq
    %v329 = vshrl.u32 %v328, 7
    %v330 = vsub.s32 1, %v329
    %v331 = vrot.slane %v296, %v330
    %v332 = vlaneseq
    %v333 = vshrl.u32 %v332, 7
    %v334 = vsub.s32 1, %v333
    %v335 = vrot.slane %v300, %v334
    %v336 = vlaneseq
    %v337 = vshrl.u32 %v336, 7
    %v338 = vsub.s32 1, %v337
    %v339 = vrot.slane %v304, %v338
    %v340 = vlaneseq
    %v341 = vshrl.u32 %v340, 7
    %v342 = vsub.s32 1, %v341
    %v343 = vrot.slane %v308, %v342
    %v344 = vlaneseq
    %v345 = vshrl.u32 %v344, 7
    %v346 = vsub.s32 1, %v345
    %v347 = vrot.slane %v312, %v346
    %v348 = vlaneseq
    %v349 = vshrl.u32 %v348, 7
    %v350 = vsub.s32 1, %v349
    %v351 = vrot.slane %v316, %v350
    %v352 = vmul.f32 %v287, %v327
    %v353 = vmul.f32 %v287, %v331
    %v354 = vmul.f32 %v287, %v335
    %v355 = vmul.f32 %v287, %v339
    %v356 = vmul.f32 %v287, %v343
    %v357 = vmul.f32 %v287, %v347
    %v358 = vmul.f32 %v287, %v351
    %366 = vrot.lane.b32.xlu0 %v352, 127
    %v367 = vpop.permute.xlu0 %366
    %368 = vrot.lane.b32.xlu0 %v353, 127
    %v369 = vpop.permute.xlu0 %368
    %370 = vrot.lane.b32.xlu0 %v354, 127
    %v371 = vpop.permute.xlu0 %370
    %372 = vrot.lane.b32.xlu0 %v355, 127
    %v373 = vpop.permute.xlu0 %372
    %374 = vrot.lane.b32.xlu0 %v356, 127
    %v375 = vpop.permute.xlu0 %374
    %376 = vrot.lane.b32.xlu0 %v357, 127
    %v377 = vpop.permute.xlu0 %376
    %378 = vrot.lane.b32.xlu0 %v358, 127
    %v379 = vpop.permute.xlu0 %378
    %v380 = vsel %vm266, %v367, %v369
    %v381 = vsel %vm266, %v369, %v371
    %v382 = vsel %vm266, %v371, %v373
    %v383 = vsel %vm266, %v373, %v375
    %v384 = vsel %vm266, %v375, %v377
    %v385 = vsel %vm266, %v377, %v379
    %v392 = vadd.f32 %v279, %v380
    %v393 = vadd.f32 %v280, %v381
    %v394 = vadd.f32 %v281, %v382
    %v395 = vadd.f32 %v282, %v383
    %v396 = vadd.f32 %v283, %v384
    %v397 = vadd.f32 %v284, %v385
    %v398 = vld [vmem:[%s1 + $0x8] sm:$0xf]
    %v399 = vunpack.c.l.bf16 %v398
    %401 = vset.pattern.permute.xlu0 0
    %402 = vperm.xlu0 %401, %v399
    %v403 = vpop.permute.xlu0 %402
    %v405 = vmul.f32 %v403, %v213
    %v406 = vmul.f32 %v403, %v217
    %v407 = vmul.f32 %v403, %v221
    %v408 = vmul.f32 %v403, %v225
    %v409 = vmul.f32 %v403, %v229
    %v410 = vmul.f32 %v403, %v233
    %v411 = vmul.f32 %v403, %v237
    %419 = vrot.lane.b32.xlu0 %v405, 126
    %v420 = vpop.permute.xlu0 %419
    %421 = vrot.lane.b32.xlu0 %v406, 126
    %v422 = vpop.permute.xlu0 %421
    %423 = vrot.lane.b32.xlu0 %v407, 126
    %v424 = vpop.permute.xlu0 %423
    %425 = vrot.lane.b32.xlu0 %v408, 126
    %v426 = vpop.permute.xlu0 %425
    %427 = vrot.lane.b32.xlu0 %v409, 126
    %v428 = vpop.permute.xlu0 %427
    %429 = vrot.lane.b32.xlu0 %v410, 126
    %v430 = vpop.permute.xlu0 %429
    %431 = vrot.lane.b32.xlu0 %v411, 126
    %v432 = vpop.permute.xlu0 %431
    %vm433 = vcmask 1031168
    %v434 = vsel %vm433, %v420, %v422
    %v435 = vsel %vm433, %v422, %v424
    %v436 = vsel %vm433, %v424, %v426
    %v437 = vsel %vm433, %v426, %v428
    %v438 = vsel %vm433, %v428, %v430
    %v439 = vsel %vm433, %v430, %v432
    %v446 = vadd.f32 %v392, %v434
    %v447 = vadd.f32 %v393, %v435
    %v448 = vadd.f32 %v394, %v436
    %v449 = vadd.f32 %v395, %v437
    %v450 = vadd.f32 %v396, %v438
    %v451 = vadd.f32 %v397, %v439
    %452 = vset.pattern.permute.xlu0 1
    %453 = vperm.xlu0 %452, %v399
    %v454 = vpop.permute.xlu0 %453
    %v456 = vmul.f32 %v454, %v327
    %v457 = vmul.f32 %v454, %v331
    %v458 = vmul.f32 %v454, %v335
    %v459 = vmul.f32 %v454, %v339
    %v460 = vmul.f32 %v454, %v343
    %v461 = vmul.f32 %v454, %v347
    %v462 = vmul.f32 %v454, %v351
    %470 = vrot.lane.b32.xlu0 %v456, 126
    %v471 = vpop.permute.xlu0 %470
    %472 = vrot.lane.b32.xlu0 %v457, 126
    %v473 = vpop.permute.xlu0 %472
    %474 = vrot.lane.b32.xlu0 %v458, 126
    %v475 = vpop.permute.xlu0 %474
    %476 = vrot.lane.b32.xlu0 %v459, 126
    %v477 = vpop.permute.xlu0 %476
    %478 = vrot.lane.b32.xlu0 %v460, 126
    %v479 = vpop.permute.xlu0 %478
    %480 = vrot.lane.b32.xlu0 %v461, 126
    %v481 = vpop.permute.xlu0 %480
    %482 = vrot.lane.b32.xlu0 %v462, 126
    %v483 = vpop.permute.xlu0 %482
    %v484 = vsel %vm433, %v471, %v473
    %v485 = vsel %vm433, %v473, %v475
    %v486 = vsel %vm433, %v475, %v477
    %v487 = vsel %vm433, %v477, %v479
    %v488 = vsel %vm433, %v479, %v481
    %v489 = vsel %vm433, %v481, %v483
    %v496 = vadd.f32 %v446, %v484
    %v497 = vadd.f32 %v447, %v485
    %v498 = vadd.f32 %v448, %v486
    %v499 = vadd.f32 %v449, %v487
    %v500 = vadd.f32 %v450, %v488
    %v501 = vadd.f32 %v451, %v489
    %v502 = vld [vmem:[%s1 + $0xc] sm:$0xf]
    %v503 = vunpack.c.l.bf16 %v502
    %505 = vset.pattern.permute.xlu0 0
    %506 = vperm.xlu0 %505, %v503
    %v507 = vpop.permute.xlu0 %506
    %v509 = vmul.f32 %v507, %v213
    %v510 = vmul.f32 %v507, %v217
    %v511 = vmul.f32 %v507, %v221
    %v512 = vmul.f32 %v507, %v225
    %v513 = vmul.f32 %v507, %v229
    %v514 = vmul.f32 %v507, %v233
    %v515 = vmul.f32 %v507, %v237
    %523 = vrot.lane.b32.xlu0 %v509, 110
    %v524 = vpop.permute.xlu0 %523
    %525 = vrot.lane.b32.xlu0 %v510, 110
    %v526 = vpop.permute.xlu0 %525
    %527 = vrot.lane.b32.xlu0 %v511, 110
    %v528 = vpop.permute.xlu0 %527
    %529 = vrot.lane.b32.xlu0 %v512, 110
    %v530 = vpop.permute.xlu0 %529
    %531 = vrot.lane.b32.xlu0 %v513, 110
    %v532 = vpop.permute.xlu0 %531
    %533 = vrot.lane.b32.xlu0 %v514, 110
    %v534 = vpop.permute.xlu0 %533
    %535 = vrot.lane.b32.xlu0 %v515, 110
    %v536 = vpop.permute.xlu0 %535
    %vm537 = vcmask 900096
    %v538 = vsel %vm537, %v524, %v526
    %v539 = vsel %vm537, %v526, %v528
    %v540 = vsel %vm537, %v528, %v530
    %v541 = vsel %vm537, %v530, %v532
    %v542 = vsel %vm537, %v532, %v534
    %v543 = vsel %vm537, %v534, %v536
    %v550 = vadd.f32 %v496, %v538
    %v551 = vadd.f32 %v497, %v539
    %v552 = vadd.f32 %v498, %v540
    %v553 = vadd.f32 %v499, %v541
    %v554 = vadd.f32 %v500, %v542
    %v555 = vadd.f32 %v501, %v543
    %556 = vset.pattern.permute.xlu0 1
    %557 = vperm.xlu0 %556, %v503
    %v558 = vpop.permute.xlu0 %557
    %v560 = vmul.f32 %v558, %v327
    %v561 = vmul.f32 %v558, %v331
    %v562 = vmul.f32 %v558, %v335
    %v563 = vmul.f32 %v558, %v339
    %v564 = vmul.f32 %v558, %v343
    %v565 = vmul.f32 %v558, %v347
    %v566 = vmul.f32 %v558, %v351
    %574 = vrot.lane.b32.xlu0 %v560, 110
    %v575 = vpop.permute.xlu0 %574
    %576 = vrot.lane.b32.xlu0 %v561, 110
    %v577 = vpop.permute.xlu0 %576
    %578 = vrot.lane.b32.xlu0 %v562, 110
    %v579 = vpop.permute.xlu0 %578
    %580 = vrot.lane.b32.xlu0 %v563, 110
    %v581 = vpop.permute.xlu0 %580
    %582 = vrot.lane.b32.xlu0 %v564, 110
    %v583 = vpop.permute.xlu0 %582
    %584 = vrot.lane.b32.xlu0 %v565, 110
    %v585 = vpop.permute.xlu0 %584
    %586 = vrot.lane.b32.xlu0 %v566, 110
    %v587 = vpop.permute.xlu0 %586
    %v588 = vsel %vm537, %v575, %v577
    %v589 = vsel %vm537, %v577, %v579
    %v590 = vsel %vm537, %v579, %v581
    %v591 = vsel %vm537, %v581, %v583
    %v592 = vsel %vm537, %v583, %v585
    %v593 = vsel %vm537, %v585, %v587
    %v600 = vadd.f32 %v550, %v588
    %v601 = vadd.f32 %v551, %v589
    %v602 = vadd.f32 %v552, %v590
    %v603 = vadd.f32 %v553, %v591
    %v604 = vadd.f32 %v554, %v592
    %v605 = vadd.f32 %v555, %v593
    %v606 = vld [vmem:[%s1 + $0x10] sm:$0xf]
    %v607 = vunpack.c.l.bf16 %v606
    %609 = vset.pattern.permute.xlu0 0
    %610 = vperm.xlu0 %609, %v607
    %v611 = vpop.permute.xlu0 %610
    %v613 = vmul.f32 %v611, %v213
    %v614 = vmul.f32 %v611, %v217
    %v615 = vmul.f32 %v611, %v221
    %v616 = vmul.f32 %v611, %v225
    %v617 = vmul.f32 %v611, %v229
    %v618 = vmul.f32 %v611, %v233
    %v619 = vmul.f32 %v611, %v237
    %627 = vrot.lane.b32.xlu0 %v613, 109
    %v628 = vpop.permute.xlu0 %627
    %629 = vrot.lane.b32.xlu0 %v614, 109
    %v630 = vpop.permute.xlu0 %629
    %631 = vrot.lane.b32.xlu0 %v615, 109
    %v632 = vpop.permute.xlu0 %631
    %633 = vrot.lane.b32.xlu0 %v616, 109
    %v634 = vpop.permute.xlu0 %633
    %635 = vrot.lane.b32.xlu0 %v617, 109
    %v636 = vpop.permute.xlu0 %635
    %637 = vrot.lane.b32.xlu0 %v618, 109
    %v638 = vpop.permute.xlu0 %637
    %639 = vrot.lane.b32.xlu0 %v619, 109
    %v640 = vpop.permute.xlu0 %639
    %vm641 = vcmask 891904
    %v642 = vsel %vm641, %v628, %v630
    %v643 = vsel %vm641, %v630, %v632
    %v644 = vsel %vm641, %v632, %v634
    %v645 = vsel %vm641, %v634, %v636
    %v646 = vsel %vm641, %v636, %v638
    %v647 = vsel %vm641, %v638, %v640
    %v654 = vadd.f32 %v600, %v642
    %v655 = vadd.f32 %v601, %v643
    %v656 = vadd.f32 %v602, %v644
    %v657 = vadd.f32 %v603, %v645
    %v658 = vadd.f32 %v604, %v646
    %v659 = vadd.f32 %v605, %v647
    %660 = vset.pattern.permute.xlu0 1
    %661 = vperm.xlu0 %660, %v607
    %v662 = vpop.permute.xlu0 %661
    %v664 = vmul.f32 %v662, %v327
    %v665 = vmul.f32 %v662, %v331
    %v666 = vmul.f32 %v662, %v335
    %v667 = vmul.f32 %v662, %v339
    %v668 = vmul.f32 %v662, %v343
    %v669 = vmul.f32 %v662, %v347
    %v670 = vmul.f32 %v662, %v351
    %678 = vrot.lane.b32.xlu0 %v664, 109
    %v679 = vpop.permute.xlu0 %678
    %680 = vrot.lane.b32.xlu0 %v665, 109
    %v681 = vpop.permute.xlu0 %680
    %682 = vrot.lane.b32.xlu0 %v666, 109
    %v683 = vpop.permute.xlu0 %682
    %684 = vrot.lane.b32.xlu0 %v667, 109
    %v685 = vpop.permute.xlu0 %684
    %686 = vrot.lane.b32.xlu0 %v668, 109
    %v687 = vpop.permute.xlu0 %686
    %688 = vrot.lane.b32.xlu0 %v669, 109
    %v689 = vpop.permute.xlu0 %688
    %690 = vrot.lane.b32.xlu0 %v670, 109
    %v691 = vpop.permute.xlu0 %690
    %v692 = vsel %vm641, %v679, %v681
    %v693 = vsel %vm641, %v681, %v683
    %v694 = vsel %vm641, %v683, %v685
    %v695 = vsel %vm641, %v685, %v687
    %v696 = vsel %vm641, %v687, %v689
    %v697 = vsel %vm641, %v689, %v691
    %v704 = vadd.f32 %v654, %v692
    %v705 = vadd.f32 %v655, %v693
    %v706 = vadd.f32 %v656, %v694
    %v707 = vadd.f32 %v657, %v695
    %v708 = vadd.f32 %v658, %v696
    %v709 = vadd.f32 %v659, %v697
    %v710 = vld [vmem:[%s1 + $0x14] sm:$0xf]
    %v711 = vunpack.c.l.bf16 %v710
    %713 = vset.pattern.permute.xlu0 0
    %714 = vperm.xlu0 %713, %v711
    %v715 = vpop.permute.xlu0 %714
    %v717 = vmul.f32 %v715, %v213
    %v718 = vmul.f32 %v715, %v217
    %v719 = vmul.f32 %v715, %v221
    %v720 = vmul.f32 %v715, %v225
    %v721 = vmul.f32 %v715, %v229
    %v722 = vmul.f32 %v715, %v233
    %v723 = vmul.f32 %v715, %v237
    %731 = vrot.lane.b32.xlu0 %v717, 108
    %v732 = vpop.permute.xlu0 %731
    %733 = vrot.lane.b32.xlu0 %v718, 108
    %v734 = vpop.permute.xlu0 %733
    %735 = vrot.lane.b32.xlu0 %v719, 108
    %v736 = vpop.permute.xlu0 %735
    %737 = vrot.lane.b32.xlu0 %v720, 108
    %v738 = vpop.permute.xlu0 %737
    %739 = vrot.lane.b32.xlu0 %v721, 108
    %v740 = vpop.permute.xlu0 %739
    %741 = vrot.lane.b32.xlu0 %v722, 108
    %v742 = vpop.permute.xlu0 %741
    %743 = vrot.lane.b32.xlu0 %v723, 108
    %v744 = vpop.permute.xlu0 %743
    %vm745 = vcmask 883712
    %v746 = vsel %vm745, %v732, %v734
    %v747 = vsel %vm745, %v734, %v736
    %v748 = vsel %vm745, %v736, %v738
    %v749 = vsel %vm745, %v738, %v740
    %v750 = vsel %vm745, %v740, %v742
    %v751 = vsel %vm745, %v742, %v744
    %v758 = vadd.f32 %v704, %v746
    %v759 = vadd.f32 %v705, %v747
    %v760 = vadd.f32 %v706, %v748
    %v761 = vadd.f32 %v707, %v749
    %v762 = vadd.f32 %v708, %v750
    %v763 = vadd.f32 %v709, %v751
    %764 = vset.pattern.permute.xlu0 1
    %765 = vperm.xlu0 %764, %v711
    %v766 = vpop.permute.xlu0 %765
    %v768 = vmul.f32 %v766, %v327
    %v769 = vmul.f32 %v766, %v331
    %v770 = vmul.f32 %v766, %v335
    %v771 = vmul.f32 %v766, %v339
    %v772 = vmul.f32 %v766, %v343
    %v773 = vmul.f32 %v766, %v347
    %v774 = vmul.f32 %v766, %v351
    %782 = vrot.lane.b32.xlu0 %v768, 108
    %v783 = vpop.permute.xlu0 %782
    %784 = vrot.lane.b32.xlu0 %v769, 108
    %v785 = vpop.permute.xlu0 %784
    %786 = vrot.lane.b32.xlu0 %v770, 108
    %v787 = vpop.permute.xlu0 %786
    %788 = vrot.lane.b32.xlu0 %v771, 108
    %v789 = vpop.permute.xlu0 %788
    %790 = vrot.lane.b32.xlu0 %v772, 108
    %v791 = vpop.permute.xlu0 %790
    %792 = vrot.lane.b32.xlu0 %v773, 108
    %v793 = vpop.permute.xlu0 %792
    %794 = vrot.lane.b32.xlu0 %v774, 108
    %v795 = vpop.permute.xlu0 %794
    %v796 = vsel %vm745, %v783, %v785
    %v797 = vsel %vm745, %v785, %v787
    %v798 = vsel %vm745, %v787, %v789
    %v799 = vsel %vm745, %v789, %v791
    %v800 = vsel %vm745, %v791, %v793
    %v801 = vsel %vm745, %v793, %v795
    %v808 = vadd.f32 %v758, %v796
    %v809 = vadd.f32 %v759, %v797
    %v810 = vadd.f32 %v760, %v798
    %v811 = vadd.f32 %v761, %v799
    %v812 = vadd.f32 %v762, %v800
    %v813 = vadd.f32 %v763, %v801
    %v814 = vld [vmem:[%s1 + $0x18] sm:$0xf]
    %v815 = vunpack.c.l.bf16 %v814
    %817 = vset.pattern.permute.xlu0 0
    %818 = vperm.xlu0 %817, %v815
    %v819 = vpop.permute.xlu0 %818
    %v821 = vmul.f32 %v819, %v213
    %v822 = vmul.f32 %v819, %v217
    %v823 = vmul.f32 %v819, %v221
    %v824 = vmul.f32 %v819, %v225
    %v825 = vmul.f32 %v819, %v229
    %v826 = vmul.f32 %v819, %v233
    %v827 = vmul.f32 %v819, %v237
    %835 = vrot.lane.b32.xlu0 %v821, 92
    %v836 = vpop.permute.xlu0 %835
    %837 = vrot.lane.b32.xlu0 %v822, 92
    %v838 = vpop.permute.xlu0 %837
    %839 = vrot.lane.b32.xlu0 %v823, 92
    %v840 = vpop.permute.xlu0 %839
    %841 = vrot.lane.b32.xlu0 %v824, 92
    %v842 = vpop.permute.xlu0 %841
    %843 = vrot.lane.b32.xlu0 %v825, 92
    %v844 = vpop.permute.xlu0 %843
    %845 = vrot.lane.b32.xlu0 %v826, 92
    %v846 = vpop.permute.xlu0 %845
    %847 = vrot.lane.b32.xlu0 %v827, 92
    %v848 = vpop.permute.xlu0 %847
    %vm849 = vcmask 752640
    %v850 = vsel %vm849, %v836, %v838
    %v851 = vsel %vm849, %v838, %v840
    %v852 = vsel %vm849, %v840, %v842
    %v853 = vsel %vm849, %v842, %v844
    %v854 = vsel %vm849, %v844, %v846
    %v855 = vsel %vm849, %v846, %v848
    %v862 = vadd.f32 %v808, %v850
    %v863 = vadd.f32 %v809, %v851
    %v864 = vadd.f32 %v810, %v852
    %v865 = vadd.f32 %v811, %v853
    %v866 = vadd.f32 %v812, %v854
    %v867 = vadd.f32 %v813, %v855
    %868 = vset.pattern.permute.xlu0 1
    %869 = vperm.xlu0 %868, %v815
    %v870 = vpop.permute.xlu0 %869
    %v872 = vmul.f32 %v870, %v327
    %v873 = vmul.f32 %v870, %v331
    %v874 = vmul.f32 %v870, %v335
    %v875 = vmul.f32 %v870, %v339
    %v876 = vmul.f32 %v870, %v343
    %v877 = vmul.f32 %v870, %v347
    %v878 = vmul.f32 %v870, %v351
    %886 = vrot.lane.b32.xlu0 %v872, 92
    %v887 = vpop.permute.xlu0 %886
    %888 = vrot.lane.b32.xlu0 %v873, 92
    %v889 = vpop.permute.xlu0 %888
    %890 = vrot.lane.b32.xlu0 %v874, 92
    %v891 = vpop.permute.xlu0 %890
    %892 = vrot.lane.b32.xlu0 %v875, 92
    %v893 = vpop.permute.xlu0 %892
    %894 = vrot.lane.b32.xlu0 %v876, 92
    %v895 = vpop.permute.xlu0 %894
    %896 = vrot.lane.b32.xlu0 %v877, 92
    %v897 = vpop.permute.xlu0 %896
    %898 = vrot.lane.b32.xlu0 %v878, 92
    %v899 = vpop.permute.xlu0 %898
    %v900 = vsel %vm849, %v887, %v889
    %v901 = vsel %vm849, %v889, %v891
    %v902 = vsel %vm849, %v891, %v893
    %v903 = vsel %vm849, %v893, %v895
    %v904 = vsel %vm849, %v895, %v897
    %v905 = vsel %vm849, %v897, %v899
    %v912 = vadd.f32 %v862, %v900
    %v913 = vadd.f32 %v863, %v901
    %v914 = vadd.f32 %v864, %v902
    %v915 = vadd.f32 %v865, %v903
    %v916 = vadd.f32 %v866, %v904
    %v917 = vadd.f32 %v867, %v905
    %v918 = vld [vmem:[%s1 + $0x1c] sm:$0xf]
    %v919 = vunpack.c.l.bf16 %v918
    %921 = vset.pattern.permute.xlu0 0
    %922 = vperm.xlu0 %921, %v919
    %v923 = vpop.permute.xlu0 %922
    %v925 = vmul.f32 %v923, %v213
    %v926 = vmul.f32 %v923, %v217
    %v927 = vmul.f32 %v923, %v221
    %v928 = vmul.f32 %v923, %v225
    %v929 = vmul.f32 %v923, %v229
    %v930 = vmul.f32 %v923, %v233
    %v931 = vmul.f32 %v923, %v237
    %939 = vrot.lane.b32.xlu0 %v925, 91
    %v940 = vpop.permute.xlu0 %939
    %941 = vrot.lane.b32.xlu0 %v926, 91
    %v942 = vpop.permute.xlu0 %941
    %943 = vrot.lane.b32.xlu0 %v927, 91
    %v944 = vpop.permute.xlu0 %943
    %945 = vrot.lane.b32.xlu0 %v928, 91
    %v946 = vpop.permute.xlu0 %945
    %947 = vrot.lane.b32.xlu0 %v929, 91
    %v948 = vpop.permute.xlu0 %947
    %949 = vrot.lane.b32.xlu0 %v930, 91
    %v950 = vpop.permute.xlu0 %949
    %951 = vrot.lane.b32.xlu0 %v931, 91
    %v952 = vpop.permute.xlu0 %951
    %vm953 = vcmask 744448
    %v954 = vsel %vm953, %v940, %v942
    %v955 = vsel %vm953, %v942, %v944
    %v956 = vsel %vm953, %v944, %v946
    %v957 = vsel %vm953, %v946, %v948
    %v958 = vsel %vm953, %v948, %v950
    %v959 = vsel %vm953, %v950, %v952
    %v966 = vadd.f32 %v912, %v954
    %v967 = vadd.f32 %v913, %v955
    %v968 = vadd.f32 %v914, %v956
    %v969 = vadd.f32 %v915, %v957
    %v970 = vadd.f32 %v916, %v958
    %v971 = vadd.f32 %v917, %v959
    %972 = vset.pattern.permute.xlu0 1
    %973 = vperm.xlu0 %972, %v919
    %v974 = vpop.permute.xlu0 %973
    %v976 = vmul.f32 %v974, %v327
    %v977 = vmul.f32 %v974, %v331
    %v978 = vmul.f32 %v974, %v335
    %v979 = vmul.f32 %v974, %v339
    %v980 = vmul.f32 %v974, %v343
    %v981 = vmul.f32 %v974, %v347
    %v982 = vmul.f32 %v974, %v351
    %990 = vrot.lane.b32.xlu0 %v976, 91
    %v991 = vpop.permute.xlu0 %990
    %992 = vrot.lane.b32.xlu0 %v977, 91
    %v993 = vpop.permute.xlu0 %992
    %994 = vrot.lane.b32.xlu0 %v978, 91
    %v995 = vpop.permute.xlu0 %994
    %996 = vrot.lane.b32.xlu0 %v979, 91
    %v997 = vpop.permute.xlu0 %996
    %998 = vrot.lane.b32.xlu0 %v980, 91
    %v999 = vpop.permute.xlu0 %998
    %1000 = vrot.lane.b32.xlu0 %v981, 91
    %v1001 = vpop.permute.xlu0 %1000
    %1002 = vrot.lane.b32.xlu0 %v982, 91
    %v1003 = vpop.permute.xlu0 %1002
    %v1004 = vsel %vm953, %v991, %v993
    %v1005 = vsel %vm953, %v993, %v995
    %v1006 = vsel %vm953, %v995, %v997
    %v1007 = vsel %vm953, %v997, %v999
    %v1008 = vsel %vm953, %v999, %v1001
    %v1009 = vsel %vm953, %v1001, %v1003
    %v1016 = vadd.f32 %v966, %v1004
    %v1017 = vadd.f32 %v967, %v1005
    %v1018 = vadd.f32 %v968, %v1006
    %v1019 = vadd.f32 %v969, %v1007
    %v1020 = vadd.f32 %v970, %v1008
    %v1021 = vadd.f32 %v971, %v1009
    %v1022 = vld [vmem:[%s1 + $0x20] sm:$0xf]
    %v1023 = vunpack.c.l.bf16 %v1022
    %1025 = vset.pattern.permute.xlu0 0
    %1026 = vperm.xlu0 %1025, %v1023
    %v1027 = vpop.permute.xlu0 %1026
    %v1029 = vmul.f32 %v1027, %v213
    %v1030 = vmul.f32 %v1027, %v217
    %v1031 = vmul.f32 %v1027, %v221
    %v1032 = vmul.f32 %v1027, %v225
    %v1033 = vmul.f32 %v1027, %v229
    %v1034 = vmul.f32 %v1027, %v233
    %v1035 = vmul.f32 %v1027, %v237
    %1043 = vrot.lane.b32.xlu0 %v1029, 90
    %v1044 = vpop.permute.xlu0 %1043
    %1045 = vrot.lane.b32.xlu0 %v1030, 90
    %v1046 = vpop.permute.xlu0 %1045
    %1047 = vrot.lane.b32.xlu0 %v1031, 90
    %v1048 = vpop.permute.xlu0 %1047
    %1049 = vrot.lane.b32.xlu0 %v1032, 90
    %v1050 = vpop.permute.xlu0 %1049
    %1051 = vrot.lane.b32.xlu0 %v1033, 90
    %v1052 = vpop.permute.xlu0 %1051
    %1053 = vrot.lane.b32.xlu0 %v1034, 90
    %v1054 = vpop.permute.xlu0 %1053
    %1055 = vrot.lane.b32.xlu0 %v1035, 90
    %v1056 = vpop.permute.xlu0 %1055
    %vm1057 = vcmask 736256
    %v1058 = vsel %vm1057, %v1044, %v1046
    %v1059 = vsel %vm1057, %v1046, %v1048
    %v1060 = vsel %vm1057, %v1048, %v1050
    %v1061 = vsel %vm1057, %v1050, %v1052
    %v1062 = vsel %vm1057, %v1052, %v1054
    %v1063 = vsel %vm1057, %v1054, %v1056
    %v1070 = vadd.f32 %v1016, %v1058
    %v1071 = vadd.f32 %v1017, %v1059
    %v1072 = vadd.f32 %v1018, %v1060
    %v1073 = vadd.f32 %v1019, %v1061
    %v1074 = vadd.f32 %v1020, %v1062
    %v1075 = vadd.f32 %v1021, %v1063
    %1076 = vset.pattern.permute.xlu0 1
    %1077 = vperm.xlu0 %1076, %v1023
    %v1078 = vpop.permute.xlu0 %1077
    %v1080 = vmul.f32 %v1078, %v327
    %v1081 = vmul.f32 %v1078, %v331
    %v1082 = vmul.f32 %v1078, %v335
    %v1083 = vmul.f32 %v1078, %v339
    %v1084 = vmul.f32 %v1078, %v343
    %v1085 = vmul.f32 %v1078, %v347
    %v1086 = vmul.f32 %v1078, %v351
    %1094 = vrot.lane.b32.xlu0 %v1080, 90
    %v1095 = vpop.permute.xlu0 %1094
    %1096 = vrot.lane.b32.xlu0 %v1081, 90
    %v1097 = vpop.permute.xlu0 %1096
    %1098 = vrot.lane.b32.xlu0 %v1082, 90
    %v1099 = vpop.permute.xlu0 %1098
    %1100 = vrot.lane.b32.xlu0 %v1083, 90
    %v1101 = vpop.permute.xlu0 %1100
    %1102 = vrot.lane.b32.xlu0 %v1084, 90
    %v1103 = vpop.permute.xlu0 %1102
    %1104 = vrot.lane.b32.xlu0 %v1085, 90
    %v1105 = vpop.permute.xlu0 %1104
    %1106 = vrot.lane.b32.xlu0 %v1086, 90
    %v1107 = vpop.permute.xlu0 %1106
    %v1108 = vsel %vm1057, %v1095, %v1097
    %v1109 = vsel %vm1057, %v1097, %v1099
    %v1110 = vsel %vm1057, %v1099, %v1101
    %v1111 = vsel %vm1057, %v1101, %v1103
    %v1112 = vsel %vm1057, %v1103, %v1105
    %v1113 = vsel %vm1057, %v1105, %v1107
    %v1120 = vadd.f32 %v1070, %v1108
    %v1121 = vadd.f32 %v1071, %v1109
    %v1122 = vadd.f32 %v1072, %v1110
    %v1123 = vadd.f32 %v1073, %v1111
    %v1124 = vadd.f32 %v1074, %v1112
    %v1125 = vadd.f32 %v1075, %v1113
    %v1126 = vld [vmem:[%s2] sm:$0xff]
    %1128 = vset.pattern.permute.xlu0 0
    %1129 = vperm.xlu0 %1128, %v1126
    %v1130 = vpop.permute.xlu0 %1129
    %v1132 = vadd.f32 %v1120, %v1130
    %v1133 = vadd.f32 %v1121, %v1130
    %v1134 = vadd.f32 %v1122, %v1130
    %v1135 = vadd.f32 %v1123, %v1130
    %v1136 = vadd.f32 %v1124, %v1130
    %v1137 = vadd.f32 %v1125, %v1130
    %1138 = vst [vmem:[#allocation2] sm:$0xff] %v1132
    %1139 = vst [vmem:[#allocation2 + $0x8] sm:$0xff] %v1133
    %1140 = vst [vmem:[#allocation2 + $0x10] sm:$0xff] %v1134
    %1141 = vst [vmem:[#allocation2 + $0x18] sm:$0xff] %v1135
    %1142 = vst [vmem:[#allocation2 + $0x20] sm:$0xff] %v1136
    %1143 = vst [vmem:[#allocation2 + $0x28] sm:$0xff] %v1137
    // Predicated region
    $region14: #{tpu_custom_call.1} parent=1 // pred_check
      _
    $region15: #{tpu_custom_call.1} parent=1 // pred_check_branch
      %1145 = sbr.rel (0) target = $region17
    $region16: #{tpu_custom_call.1} parent=1 // pred_region
      %s1147 = ssub.s32 768, 768
      %1148 = vsyncadd [#allocation3], %s1147
      %s1150 = sshll.u32 [#allocation2], 4
      %s1151 = int_to_ptr.vmem [resolvable:$true] %s1150
      %1153 = dma.vmem_to_hbm [thread:$0]  %s1151, 768, %s3, [#allocation3]
    $region17: #{tpu_custom_call.1} parent=1 // pred_fallthru
      _
    // Predicated region
    $region18: #{tpu_custom_call.1} parent=1 // pred_check
      _
    $region19: #{tpu_custom_call.1} parent=1 // pred_check_branch
      %1155 = sbr.rel (0) target = $region21
    $region20: #{tpu_custom_call.1} parent=1 // pred_region
      %1156 = dma.done [#allocation3], 768
    $region21: #{tpu_custom_call.1} parent=1 // pred_fallthru
      _
    %1157 = vsyncpa [#allocation3], 1

</llo_original>
